<compile_context>
chip_gen: v6e
topology: v6e:2x2x1
jax: 0.10.0
libtpu: 0.0.40
codegen_flags: <defaults>
</compile_context>

<pallas_src>
import functools

import jax
import jax.numpy as jnp
from jax.experimental import pallas as pl
from jax.experimental.pallas import tpu as pltpu


def _pick_batch_tile(batch: int, block_m: int) -> int:
    """Largest tile <= block_m that is a multiple of 8 and divides `batch`."""
    if batch % 8 != 0:
        raise ValueError(f"batch ({batch}) must be a multiple of 8")
    tb = min(block_m, batch)
    tb -= tb % 8
    while batch % tb != 0:
        tb -= 8
    return tb


def _embed_kernel(x_ref, w1_ref, b1_ref, w2_ref, b2_ref, o_ref):
    # x_ref : (tb, D_in)  bf16, streams over the grid
    # w1_ref: (D_in, H)   bf16, VMEM-resident (constant index_map)
    # b1_ref: (1, H)      f32,  resident
    # w2_ref: (H, E)      bf16, resident
    # b2_ref: (1, E)      f32,  resident
    # o_ref : (tb, E)     f32
    x = x_ref[...]
    # MXU pass 1: bf16 x bf16 -> f32 accumulate.
    h = jnp.dot(x, w1_ref[...], preferred_element_type=jnp.float32)
    # Bias + ReLU epilogue kept in f32 on the VPU (v5e has no bf16 VALU).
    h = jnp.maximum(h + b1_ref[...], 0.0)
    # Cast only as the LHS of the second MXU pass.
    h = h.astype(w2_ref.dtype)
    out = jnp.dot(h, w2_ref[...], preferred_element_type=jnp.float32)
    o_ref[...] = (out + b2_ref[...]).astype(o_ref.dtype)


def embed_pallas(x_stacked, params, *, block_m=512,
                 compute_dtype=jnp.bfloat16):
    """Apply the 2-layer MLP to a stacked (G, B, D_in) batch in one kernel.

    Returns a (G, B, E) float32 array.  Weights stay resident in VMEM while
    (branch, batch-tile) activation blocks stream through the pipeline.
    """
    w1, b1, w2, b2 = params
    G, B, D_in = x_stacked.shape
    H = w1.shape[1]
    E = w2.shape[1]

    tb = _pick_batch_tile(B, block_m)
    grid = (G, B // tb)

    # bf16 inputs: halves activation HBM bytes and uses the native MXU path.
    x_c = x_stacked.astype(compute_dtype)
    w1_c = w1.astype(compute_dtype)
    w2_c = w2.astype(compute_dtype)
    b1_c = b1.astype(jnp.float32)
    b2_c = b2.astype(jnp.float32)

    act_bytes = jnp.dtype(compute_dtype).itemsize
    cost = pl.CostEstimate(
        flops=2 * G * B * (D_in * H + H * E),
        transcendentals=0,
        bytes_accessed=(
            act_bytes * (G * B * D_in + D_in * H + H * E)
            + 4 * (H + E + G * B * E)
        ),
    )

    out = pl.pallas_call(
        _embed_kernel,
        out_shape=jax.ShapeDtypeStruct((G, B, E), jnp.float32),
        grid=grid,
        in_specs=[
            # Activations: one (branch, batch-tile) block per grid step.
            pl.BlockSpec((None, tb, D_in), lambda b, i: (b, i, 0)),
            # Weights / biases: constant index_map -> VMEM-resident.
            pl.BlockSpec((D_in, H), lambda b, i: (0, 0)),
            pl.BlockSpec((1, H), lambda b, i: (0, 0)),
            pl.BlockSpec((H, E), lambda b, i: (0, 0)),
            pl.BlockSpec((1, E), lambda b, i: (0, 0)),
        ],
        out_specs=pl.BlockSpec((None, tb, E), lambda b, i: (b, i, 0)),
        compiler_params=pltpu.CompilerParams(
            # Branch and batch-tile axes are independent -> shard across both
            # TensorCores on v7x (>= 3 parallel steps even when B fits one tile).
            dimension_semantics=("parallel", "parallel"),
        ),
        cost_estimate=cost,
    )(x_c, w1_c, b1_c, w2_c, b2_c)

    return out


@functools.partial(jax.jit, static_argnames=("block_m", "compute_dtype"))
def triplet_net(x1, x2, x3, params, *, block_m=512,
                compute_dtype=jnp.bfloat16):
    """TripletNet.forward: shared embedding net applied to x1, x2, x3."""
    x = jnp.stack([x1, x2, x3], axis=0)  # (3, B, D_in); the only wrapper copy
    out = embed_pallas(x, params, block_m=block_m, compute_dtype=compute_dtype)
    return out[0], out[1], out[2]


@functools.partial(jax.jit, static_argnames=("block_m", "compute_dtype"))
def embed(x, params, *, block_m=512, compute_dtype=jnp.bfloat16):
    """TripletNet.embed: embedding net applied to a single (B, D_in) batch."""
    out = embed_pallas(x[None], params, block_m=block_m,
                       compute_dtype=compute_dtype)
    return out[0]


def init_params(key, d_in, hidden, embed_dim):
    """Deterministic parameter init (synthetic; mimics nn.Linear shapes)."""
    k1, k2 = jax.random.split(key)
    w1 = jax.random.normal(k1, (d_in, hidden), jnp.float32) / jnp.sqrt(d_in)
    b1 = jnp.zeros((1, hidden), jnp.float32)
    w2 = jax.random.normal(k2, (hidden, embed_dim), jnp.float32) / jnp.sqrt(hidden)
    b2 = jnp.zeros((1, embed_dim), jnp.float32)
    return w1, b1, w2, b2


def _embed_ref(x, params, compute_dtype):
    """Pure-JAX reference that mirrors the kernel's precision choices."""
    w1, b1, w2, b2 = params
    h = jnp.dot(x.astype(compute_dtype), w1.astype(compute_dtype),
                preferred_element_type=jnp.float32)
    h = jnp.maximum(h + b1, 0.0)
    out = jnp.dot(h.astype(compute_dtype), w2.astype(compute_dtype),
                  preferred_element_type=jnp.float32)
    return out + b2


def triplet_net_ref(x1, x2, x3, params, compute_dtype=jnp.bfloat16):
    return (_embed_ref(x1, params, compute_dtype),
            _embed_ref(x2, params, compute_dtype),
            _embed_ref(x3, params, compute_dtype))


def triplet_net_ref_f32(x1, x2, x3, params):
    """Full-precision reference (loose-tolerance sanity check vs bf16 MXU)."""
    w1, b1, w2, b2 = params

    def e(x):
        h = jnp.maximum(
            jnp.dot(x, w1, precision=jax.lax.Precision.HIGHEST) + b1, 0.0)
        return jnp.dot(h, w2, precision=jax.lax.Precision.HIGHEST) + b2

    return e(x1), e(x2), e(x3)


if __name__ == "__main__":
    # Lane-dense feature dims (multiples of 128) keep MXU columns full and the
    # output store unmasked; batch kept small for the demo (tb resolves to 32).
    B, D_IN, HIDDEN, EMBED = 32, 128, 256, 128

    key = jax.random.PRNGKey(0)
    kx1, kx2, kx3, kp = jax.random.split(key, 4)
    x1 = jax.random.normal(kx1, (B, D_IN), jnp.float32)
    x2 = jax.random.normal(kx2, (B, D_IN), jnp.float32)
    x3 = jax.random.normal(kx3, (B, D_IN), jnp.float32)
    params = init_params(kp, D_IN, HIDDEN, EMBED)

    o1, o2, o3 = jax.block_until_ready(triplet_net(x1, x2, x3, params))

    assert o1.shape == (B, EMBED) and o2.shape == (B, EMBED) and o3.shape == (B, EMBED)

    # Tight check against a matched-precision (bf16 MXU, f32 accumulate) ref.
    r1, r2, r3 = triplet_net_ref(x1, x2, x3, params)
    assert jnp.allclose(o1, r1, atol=1e-3, rtol=1e-3)
    assert jnp.allclose(o2, r2, atol=1e-3, rtol=1e-3)
    assert jnp.allclose(o3, r3, atol=1e-3, rtol=1e-3)

    # Loose sanity check against the full-precision f32 reference.
    f1, f2, f3 = triplet_net_ref_f32(x1, x2, x3, params)
    assert jnp.allclose(o1, f1, atol=5e-2, rtol=5e-2)
    assert jnp.allclose(o2, f2, atol=5e-2, rtol=5e-2)
    assert jnp.allclose(o3, f3, atol=5e-2, rtol=5e-2)

    print("KERNEL_OK")
</pallas_src>

<mosaic_0001>
module attributes {stable_mosaic.version = 11 : i64} {
  func.func @_embed_kernel(%arg0: i32, %arg1: i32, %arg2: memref<1x32x128xbf16, #tpu.memory_space<vmem>>, %arg3: memref<128x256xbf16, #tpu.memory_space<vmem>>, %arg4: memref<1x256xf32, #tpu.memory_space<vmem>>, %arg5: memref<256x128xbf16, #tpu.memory_space<vmem>>, %arg6: memref<1x128xf32, #tpu.memory_space<vmem>>, %arg7: memref<1x32x128xf32, #tpu.memory_space<vmem>>) attributes {dimension_semantics = [#tpu.dimension_semantics<parallel>, #tpu.dimension_semantics<parallel>], iteration_bounds = array<i64: 3, 1>, scalar_prefetch = 0 : i64, scratch_operands = 0 : i64, tpu.core_type = #tpu.core_type<tc>, window_params = [{transform_indices = @transform_0, window_bounds = array<i64: 1, 32, 128>}, {pipeline_mode = #tpu.pipeline_mode<synchronous>, transform_indices = @transform_1, window_bounds = array<i64: 128, 256>}, {pipeline_mode = #tpu.pipeline_mode<synchronous>, transform_indices = @transform_2, window_bounds = array<i64: 1, 256>}, {pipeline_mode = #tpu.pipeline_mode<synchronous>, transform_indices = @transform_3, window_bounds = array<i64: 256, 128>}, {pipeline_mode = #tpu.pipeline_mode<synchronous>, transform_indices = @transform_4, window_bounds = array<i64: 1, 128>}, {transform_indices = @transform_5, window_bounds = array<i64: 1, 32, 128>}]} {
    %c0 = arith.constant 0 : index
    %c0_0 = arith.constant 0 : index
    %c0_1 = arith.constant 0 : index
    %0 = vector.load %arg2[%c0, %c0_0, %c0_1] : memref<1x32x128xbf16, #tpu.memory_space<vmem>>, vector<1x32x128xbf16>
    %1 = vector.shape_cast %0 : vector<1x32x128xbf16> to vector<32x128xbf16>
    %c0_2 = arith.constant 0 : index
    %c0_3 = arith.constant 0 : index
    %2 = vector.load %arg3[%c0_2, %c0_3] : memref<128x256xbf16, #tpu.memory_space<vmem>>, vector<128x256xbf16>
    %cst = arith.constant dense<0.000000e+00> : vector<32x256xf32>
    %3 = tpu.matmul %1, %2, %cst {dimension_numbers = #tpu.dot_dimension_numbers<[1], [0], [0], [1], [0, 0, 1, 1], [], []>} : vector<32x128xbf16>, vector<128x256xbf16>, vector<32x256xf32> -> vector<32x256xf32>
    %c0_4 = arith.constant 0 : index
    %c0_5 = arith.constant 0 : index
    %4 = vector.load %arg4[%c0_4, %c0_5] : memref<1x256xf32, #tpu.memory_space<vmem>>, vector<1x256xf32>
    %5 = vector.broadcast %4 : vector<1x256xf32> to vector<32x256xf32>
    %6 = arith.addf %3, %5 : vector<32x256xf32>
    %cst_6 = arith.constant 0.000000e+00 : f32
    %7 = vector.broadcast %cst_6 : f32 to vector<32x256xf32>
    %8 = arith.maximumf %6, %7 : vector<32x256xf32>
    %9 = arith.truncf %8 : vector<32x256xf32> to vector<32x256xbf16>
    %c0_7 = arith.constant 0 : index
    %c0_8 = arith.constant 0 : index
    %10 = vector.load %arg5[%c0_7, %c0_8] : memref<256x128xbf16, #tpu.memory_space<vmem>>, vector<256x128xbf16>
    %cst_9 = arith.constant dense<0.000000e+00> : vector<32x128xf32>
    %11 = tpu.matmul %9, %10, %cst_9 {dimension_numbers = #tpu.dot_dimension_numbers<[1], [0], [0], [1], [0, 0, 1, 1], [], []>} : vector<32x256xbf16>, vector<256x128xbf16>, vector<32x128xf32> -> vector<32x128xf32>
    %c0_10 = arith.constant 0 : index
    %c0_11 = arith.constant 0 : index
    %12 = vector.load %arg6[%c0_10, %c0_11] : memref<1x128xf32, #tpu.memory_space<vmem>>, vector<1x128xf32>
    %13 = vector.broadcast %12 : vector<1x128xf32> to vector<32x128xf32>
    %14 = arith.addf %11, %13 : vector<32x128xf32>
    %c0_12 = arith.constant 0 : index
    %c0_13 = arith.constant 0 : index
    %c0_14 = arith.constant 0 : index
    %15 = vector.load %arg7[%c0_12, %c0_13, %c0_14] : memref<1x32x128xf32, #tpu.memory_space<vmem>>, vector<1x32x128xf32>
    %16 = vector.shape_cast %15 : vector<1x32x128xf32> to vector<32x128xf32>
    %17 = vector.shape_cast %14 : vector<32x128xf32> to vector<1x32x128xf32>
    tpu.vector_store %arg7[%c0_12, %c0_13, %c0_14], %17 {strides = array<i32>} : memref<1x32x128xf32, #tpu.memory_space<vmem>>, vector<1x32x128xf32>,
    return
  }
  func.func @transform_0(%arg0: i32, %arg1: i32) -> (i32, i32, i32) {
    %c0_i32 = arith.constant 0 : i32
    %c0_i32_0 = arith.constant 0 : i32
    return %arg0, %arg1, %c0_i32 : i32, i32, i32
  }
  func.func @transform_1(%arg0: i32, %arg1: i32) -> (i32, i32) {
    %c0_i32 = arith.constant 0 : i32
    %c0_i32_0 = arith.constant 0 : i32
    %c0_i32_1 = arith.constant 0 : i32
    return %c0_i32, %c0_i32_0 : i32, i32
  }
  func.func @transform_2(%arg0: i32, %arg1: i32) -> (i32, i32) {
    %c0_i32 = arith.constant 0 : i32
    %c0_i32_0 = arith.constant 0 : i32
    %c0_i32_1 = arith.constant 0 : i32
    return %c0_i32, %c0_i32_0 : i32, i32
  }
  func.func @transform_3(%arg0: i32, %arg1: i32) -> (i32, i32) {
    %c0_i32 = arith.constant 0 : i32
    %c0_i32_0 = arith.constant 0 : i32
    %c0_i32_1 = arith.constant 0 : i32
    return %c0_i32, %c0_i32_0 : i32, i32
  }
  func.func @transform_4(%arg0: i32, %arg1: i32) -> (i32, i32) {
    %c0_i32 = arith.constant 0 : i32
    %c0_i32_0 = arith.constant 0 : i32
    %c0_i32_1 = arith.constant 0 : i32
    return %c0_i32, %c0_i32_0 : i32, i32
  }
  func.func @transform_5(%arg0: i32, %arg1: i32) -> (i32, i32, i32) {
    %c0_i32 = arith.constant 0 : i32
    %c0_i32_0 = arith.constant 0 : i32
    return %arg0, %arg1, %c0_i32 : i32, i32, i32
  }
}

</mosaic_0001>

<llo_original>
// kernel: triplet_net.1
$region0: #{triplet_net.1}
  #allocation0 [shape = 'u32[]', space=smem, size = 0x4, offset = 0x4, fixed_abs, tag = 'smem constant byte address 0x4 - core index']
  #allocation1 [shape = 'u32[144,128]{1,0:T(1,128)}', space=vmem, size = 0x12000, scoped, tag = 'internal scratch']
  %s0 = inlined_call_operand.vmem [shape: bf16[3,32,128], index: 0, kind: input, shape index: {}]
  %s1 = inlined_call_operand.vmem [shape: bf16[128,256], index: 1, kind: input, shape index: {}]
  %s2 = inlined_call_operand.vmem [shape: f32[1,256], index: 2, kind: input, shape index: {}]
  %s3 = inlined_call_operand.vmem [shape: bf16[256,128], index: 3, kind: input, shape index: {}]
  %s4 = inlined_call_operand.vmem [shape: f32[1,128], index: 4, kind: input, shape index: {}]
  %s5 = inlined_call_operand.vmem [shape: f32[3,32,128], index: 5, kind: output, shape index: {}]
  %s6 = sld [smem:[#allocation0]]
  $region53: #{triplet_net.1} parent=0
    _
  %s8 = ssub.s32 1, %s6
  %s9 = scalar_select 0, %s8, %s6
  loop: start=0, step=1, limit=5
  $region2: #{triplet_net.1} parent=0 // loop_pre_header
    _
  $region3: #{triplet_net.1} parent=0 // loop_header
    %s11 = sphi 0, %s15
    %p12 = scmp.ge.s32.totalorder %s11, 5
    %s18 = sphi 0, %s30
    %s19 = sphi 0, %s26
    %s20 = sphi 0, %s18
    %s21 = sphi 0, %s19
    %s22 = sphi 0, %s20
    %s23 = sphi 0, %s21
    %s35 = sphi 0, %s37
    %s38 = sphi 0, %s35
    %s39 = sphi 0, %s38
    %s55 = sphi 0, %s39
    %s59 = sphi 0, %s59
    %s61 = sphi 0, %s59
    %s62 = sphi 0, %s61
    %s76 = sphi 0, %s62
    %s80 = sphi 0, %s80
    %s82 = sphi 0, %s80
    %s83 = sphi 0, %s82
    %s97 = sphi 0, %s83
    %s101 = sphi 0, %s101
    %s103 = sphi 0, %s101
    %s104 = sphi 0, %s103
    %s118 = sphi 0, %s104
    %s122 = sphi 0, %s122
    %s124 = sphi 0, %s122
    %s125 = sphi 0, %s124
    %s139 = sphi 0, %s125
    %s147 = sphi 0, %s149
    %s150 = sphi 0, %s147
    %s151 = sphi 0, %s150
    %s167 = sphi 0, %s151
  $region4: #{triplet_net.1} parent=0 // loop_header_branch
    %14 = sbr.rel (%p12) target = $region8
  $region5: #{triplet_net.1} parent=0 // loop_body
    %s16 = ssub.s32 %s11, 1
    %s17 = ssub.s32 %s11, 2
    %s24 = sadd.s32 1, %s19
    %p25 = scmp.ge.s32.totalorder %s24, 1
    %s26 = scalar_select %p25, 0, %s24
    %s27 = sadd.s32 1, %s18
    %s28 = scalar_select %p25, %s27, %s18
    %p29 = scmp.ge.s32.totalorder %s28, 3
    %s30 = scalar_select %p29, 0, %s28
    %s31 = ssub.s32 %s18, %s30
    %s32 = ssub.s32 %s19, %s26
    %s33 = sor.u32 %s31, %s32
    %p34 = scmp.eq.s32.totalorder %s33, 0
    %s36 = sadd.s32 %s35, 1
    %s37 = scalar_select %p34, %s35, %s36
    %p40 = pneg %p34
    %p41 = scmp.eq.s32.totalorder %s11, 2
    %p42 = por %p40, %p41
    %p43 = scmp.ne.s32.totalorder %s35, %s38
    %p44 = scmp.eq.s32.totalorder %s11, 0
    %p45 = por %p43, %p44
    %p46 = scmp.ne.s32.totalorder %s35, %s38
    %p47 = scmp.eq.s32.totalorder %s16, 2
    %p48 = por %p46, %p47
    %p49 = scmp.ne.s32.totalorder %s38, %s39
    %p50 = scmp.eq.s32.totalorder %s16, 0
    %p51 = por %p49, %p50
    %p52 = scmp.ne.s32.totalorder %s38, %s39
    %p53 = scmp.eq.s32.totalorder %s17, 2
    %p54 = por %p52, %p53
    %p56 = scmp.ne.s32.totalorder %s39, %s55
    %p57 = scmp.eq.s32.totalorder %s17, 0
    %p58 = por %p56, %p57
    %s60 = sadd.s32 %s59, 1
    %p63 = scmp.eq.s32.totalorder %s11, 2
    %p64 = scmp.ne.s32.totalorder %s59, %s61
    %p65 = scmp.eq.s32.totalorder %s11, 0
    %p66 = por %p64, %p65
    %p67 = scmp.ne.s32.totalorder %s59, %s61
    %p68 = scmp.eq.s32.totalorder %s16, 2
    %p69 = por %p67, %p68
    %p70 = scmp.ne.s32.totalorder %s61, %s62
    %p71 = scmp.eq.s32.totalorder %s16, 0
    %p72 = por %p70, %p71
    %p73 = scmp.ne.s32.totalorder %s61, %s62
    %p74 = scmp.eq.s32.totalorder %s17, 2
    %p75 = por %p73, %p74
    %p77 = scmp.ne.s32.totalorder %s62, %s76
    %p78 = scmp.eq.s32.totalorder %s17, 0
    %p79 = por %p77, %p78
    %s81 = sadd.s32 %s80, 1
    %p84 = scmp.eq.s32.totalorder %s11, 2
    %p85 = scmp.ne.s32.totalorder %s80, %s82
    %p86 = scmp.eq.s32.totalorder %s11, 0
    %p87 = por %p85, %p86
    %p88 = scmp.ne.s32.totalorder %s80, %s82
    %p89 = scmp.eq.s32.totalorder %s16, 2
    %p90 = por %p88, %p89
    %p91 = scmp.ne.s32.totalorder %s82, %s83
    %p92 = scmp.eq.s32.totalorder %s16, 0
    %p93 = por %p91, %p92
    %p94 = scmp.ne.s32.totalorder %s82, %s83
    %p95 = scmp.eq.s32.totalorder %s17, 2
    %p96 = por %p94, %p95
    %p98 = scmp.ne.s32.totalorder %s83, %s97
    %p99 = scmp.eq.s32.totalorder %s17, 0
    %p100 = por %p98, %p99
    %s102 = sadd.s32 %s101, 1
    %p105 = scmp.eq.s32.totalorder %s11, 2
    %p106 = scmp.ne.s32.totalorder %s101, %s103
    %p107 = scmp.eq.s32.totalorder %s11, 0
    %p108 = por %p106, %p107
    %p109 = scmp.ne.s32.totalorder %s101, %s103
    %p110 = scmp.eq.s32.totalorder %s16, 2
    %p111 = por %p109, %p110
    %p112 = scmp.ne.s32.totalorder %s103, %s104
    %p113 = scmp.eq.s32.totalorder %s16, 0
    %p114 = por %p112, %p113
    %p115 = scmp.ne.s32.totalorder %s103, %s104
    %p116 = scmp.eq.s32.totalorder %s17, 2
    %p117 = por %p115, %p116
    %p119 = scmp.ne.s32.totalorder %s104, %s118
    %p120 = scmp.eq.s32.totalorder %s17, 0
    %p121 = por %p119, %p120
    %s123 = sadd.s32 %s122, 1
    %p126 = scmp.eq.s32.totalorder %s11, 2
    %p127 = scmp.ne.s32.totalorder %s122, %s124
    %p128 = scmp.eq.s32.totalorder %s11, 0
    %p129 = por %p127, %p128
    %p130 = scmp.ne.s32.totalorder %s122, %s124
    %p131 = scmp.eq.s32.totalorder %s16, 2
    %p132 = por %p130, %p131
    %p133 = scmp.ne.s32.totalorder %s124, %s125
    %p134 = scmp.eq.s32.totalorder %s16, 0
    %p135 = por %p133, %p134
    %p136 = scmp.ne.s32.totalorder %s124, %s125
    %p137 = scmp.eq.s32.totalorder %s17, 2
    %p138 = por %p136, %p137
    %p140 = scmp.ne.s32.totalorder %s125, %s139
    %p141 = scmp.eq.s32.totalorder %s17, 0
    %p142 = por %p140, %p141
    %s143 = ssub.s32 %s18, %s30
    %s144 = ssub.s32 %s19, %s26
    %s145 = sor.u32 %s143, %s144
    %p146 = scmp.eq.s32.totalorder %s145, 0
    %s148 = sadd.s32 %s147, 1
    %s149 = scalar_select %p146, %s147, %s148
    %p152 = pneg %p146
    %p153 = scmp.eq.s32.totalorder %s11, 2
    %p154 = por %p152, %p153
    %p155 = scmp.ne.s32.totalorder %s147, %s150
    %p156 = scmp.eq.s32.totalorder %s11, 0
    %p157 = por %p155, %p156
    %p158 = scmp.ne.s32.totalorder %s147, %s150
    %p159 = scmp.eq.s32.totalorder %s16, 2
    %p160 = por %p158, %p159
    %p161 = scmp.ne.s32.totalorder %s150, %s151
    %p162 = scmp.eq.s32.totalorder %s16, 0
    %p163 = por %p161, %p162
    %p164 = scmp.ne.s32.totalorder %s150, %s151
    %p165 = scmp.eq.s32.totalorder %s17, 2
    %p166 = por %p164, %p165
    %p168 = scmp.ne.s32.totalorder %s151, %s167
    %p169 = scmp.eq.s32.totalorder %s17, 0
    %p170 = por %p168, %p169
    %p171 = scmp.le.s32.totalorder 1, %s11
    %p172 = scmp.lt.s32.totalorder %s11, 4
    %p173 = pnand %p171, %p172
    %p174 = pneg %p173
    // Predicated region
    $region9: #{triplet_net.1} parent=5 // pred_check
      _
    $region10: #{triplet_net.1} parent=5 // pred_check_branch
      %176 = sbr.rel (%p173) target = $region12
    $region11: #{triplet_net.1} parent=5 // pred_region
      %s177 = ssub.s32 %s11, 1
      // Predicated region
      $region13: #{triplet_net.1} parent=11 // pred_check
        %p178 = pneg %p72
      $region14: #{triplet_net.1} parent=11 // pred_check_branch
        %180 = sbr.rel (%p178) target = $region16
      $region15: #{triplet_net.1} parent=11 // pred_region
        _
      $region16: #{triplet_net.1} parent=11 // pred_fallthru
        _
      // Predicated region
      $region17: #{triplet_net.1} parent=11 // pred_check
        %p181 = pneg %p93
      $region18: #{triplet_net.1} parent=11 // pred_check_branch
        %183 = sbr.rel (%p181) target = $region20
      $region19: #{triplet_net.1} parent=11 // pred_region
        _
      $region20: #{triplet_net.1} parent=11 // pred_fallthru
        _
      // Predicated region
      $region21: #{triplet_net.1} parent=11 // pred_check
        %p184 = pneg %p114
      $region22: #{triplet_net.1} parent=11 // pred_check_branch
        %186 = sbr.rel (%p184) target = $region24
      $region23: #{triplet_net.1} parent=11 // pred_region
        _
      $region24: #{triplet_net.1} parent=11 // pred_fallthru
        _
      // Predicated region
      $region25: #{triplet_net.1} parent=11 // pred_check
        %p187 = pneg %p135
      $region26: #{triplet_net.1} parent=11 // pred_check_branch
        %189 = sbr.rel (%p187) target = $region28
      $region27: #{triplet_net.1} parent=11 // pred_region
        _
      $region28: #{triplet_net.1} parent=11 // pred_fallthru
        _
    $region12: #{triplet_net.1} parent=5 // pred_fallthru
      _
    %p190 = scmp.lt.s32.totalorder %s11, 3
    // Predicated region
    $region29: #{triplet_net.1} parent=5 // pred_check
      %p191 = pneg %p190
    $region30: #{triplet_net.1} parent=5 // pred_check_branch
      %193 = sbr.rel (%p191) target = $region32
    $region31: #{triplet_net.1} parent=5 // pred_region
      // Predicated region
      $region33: #{triplet_net.1} parent=31 // pred_check
        %p194 = pneg %p45
      $region34: #{triplet_net.1} parent=31 // pred_check_branch
        %196 = sbr.rel (%p194) target = $region36
      $region35: #{triplet_net.1} parent=31 // pred_region
        %s197 = smul.u32 4, %s19
        %p198 = scmp.lt.s32.totalorder %s18, 2
        %s199 = scalar_select %p198, %s18, 2
        %p200 = scmp.lt.s32.totalorder %s197, 3
        %s201 = scalar_select %p200, %s197, 3
        %s202 = smul.addr %s199, 4
        %s203 = sadd.s32 %s201, %s202
        %s204 = smul.addr %s203, 4
        %s205 = scalar_lea.vmem %s0, %s204
        %s206 = smul.u32 4, %s19
      $region36: #{triplet_net.1} parent=31 // pred_fallthru
        _
    $region32: #{triplet_net.1} parent=5 // pred_fallthru
      _
    %p207 = scmp.le.s32.totalorder 1, %s11
    %p208 = scmp.lt.s32.totalorder %s11, 4
    %p209 = pnand %p207, %p208
    %p210 = pneg %p209
    // Predicated region
    $region37: #{triplet_net.1} parent=5 // pred_check
      _
    $region38: #{triplet_net.1} parent=5 // pred_check_branch
      %212 = sbr.rel (%p209) target = $region40
    $region39: #{triplet_net.1} parent=5 // pred_region
      %s213 = ssub.s32 %s11, 1
      %s214 = smul.u32 4, %s21
      %p215 = scmp.lt.s32.totalorder %s20, 2
      %s216 = scalar_select %p215, %s20, 2
      %p217 = scmp.lt.s32.totalorder %s214, 3
      %s218 = scalar_select %p217, %s214, 3
      %s219 = smul.addr %s216, 4
      %s220 = sadd.s32 %s218, %s219
      %s221 = smul.addr %s220, 4
      %s222 = scalar_lea.vmem %s0, %s221
      %p223 = pneg %p51
      %p224 = pneg %p48
      %p225 = pneg %p72
      %p226 = pneg %p69
      %p227 = pneg %p93
      %p228 = pneg %p90
      %p229 = pneg %p114
      %p230 = pneg %p111
      %p231 = pneg %p135
      %p232 = pneg %p132
      %p233 = pneg %p163
      %p234 = pneg %p160
      %s235 = smul.u32 4, %s21
      %p236 = scmp.lt.s32.totalorder %s20, 2
      %s237 = scalar_select %p236, %s20, 2
      %p238 = scmp.lt.s32.totalorder %s235, 3
      %s239 = scalar_select %p238, %s235, 3
      %s240 = smul.addr %s237, 4
      %s241 = sadd.s32 %s239, %s240
      %s242 = smul.addr %s241, 8
      %s243 = scalar_lea.vmem %s5, %s242
      %s244 = smul.u32 4, %s21
      %p245 = scmp.lt.s32.totalorder %s20, 2
      %s246 = scalar_select %p245, %s20, 2
      %p247 = scmp.lt.s32.totalorder %s244, 3
      %s248 = scalar_select %p247, %s244, 3
      %s249 = smul.addr %s246, 4
      %s250 = sadd.s32 %s248, %s249
      %s251 = smul.addr %s250, 4
      %s252 = scalar_lea.vmem %s0, %s251
      %s253 = smul.u32 4, %s21
      %s254 = smul.u32 4, %s21
      %p255 = scmp.lt.s32.totalorder %s20, 2
      %s256 = scalar_select %p255, %s20, 2
      %p257 = scmp.lt.s32.totalorder %s254, 3
      %s258 = scalar_select %p257, %s254, 3
      %s259 = smul.addr %s256, 4
      %s260 = sadd.s32 %s258, %s259
      %s261 = smul.addr %s260, 8
      %s262 = scalar_lea.vmem %s5, %s261
      %s263 = smul.u32 4, %s21
      %v265 = vld [vmem:[%s252] sm:$0xf]
      %v266 = vld [vmem:[%s252 + $0x4] sm:$0xf]
      %v267 = vld [vmem:[%s252 + $0x8] sm:$0xf]
      %v268 = vld [vmem:[%s252 + $0xc] sm:$0xf]
      %v269 = vld [vmem:[%s1] sm:$0xff]
      %v270 = vld [vmem:[%s1 + $0x8] sm:$0xff]
      %v271 = vld [vmem:[%s1 + $0x10] sm:$0xff]
      %v272 = vld [vmem:[%s1 + $0x18] sm:$0xff]
      %v273 = vld [vmem:[%s1 + $0x20] sm:$0xff]
      %v274 = vld [vmem:[%s1 + $0x28] sm:$0xff]
      %v275 = vld [vmem:[%s1 + $0x30] sm:$0xff]
      %v276 = vld [vmem:[%s1 + $0x38] sm:$0xff]
      %v277 = vld [vmem:[%s1 + $0x40] sm:$0xff]
      %v278 = vld [vmem:[%s1 + $0x48] sm:$0xff]
      %v279 = vld [vmem:[%s1 + $0x50] sm:$0xff]
      %v280 = vld [vmem:[%s1 + $0x58] sm:$0xff]
      %v281 = vld [vmem:[%s1 + $0x60] sm:$0xff]
      %v282 = vld [vmem:[%s1 + $0x68] sm:$0xff]
      %v283 = vld [vmem:[%s1 + $0x70] sm:$0xff]
      %v284 = vld [vmem:[%s1 + $0x78] sm:$0xff]
      %v285 = vld [vmem:[%s2] sm:$0x3]
      %v287 = vlaneseq
      %v288 = vshrl.u32 %v287, 7
      %v289 = vsub.s32 0, %v288
      %v290 = vrot.slane %v285, %v289
      %v291 = vlaneseq
      %v292 = vshrl.u32 %v291, 7
      %v293 = vsub.s32 1, %v292
      %v294 = vrot.slane %v285, %v293
      %v301 = vunpack.c.l.b16 %v265
      %v302 = vunpack.c.l.b16 %v266
      %v303 = vunpack.c.l.b16 %v267
      %v304 = vunpack.c.l.b16 %v268
      %v305 = vpack.c.b16 %v302, %v301
      %v306 = vpack.c.b16 %v304, %v303
      %v325 = vunpack.c.l.b16 %v269
      %v326 = vunpack.c.h.b16 %v269
      %v327 = vunpack.c.l.b16 %v270
      %v328 = vunpack.c.h.b16 %v270
      %v329 = vunpack.c.l.b16 %v271
      %v330 = vunpack.c.h.b16 %v271
      %v331 = vunpack.c.l.b16 %v272
      %v332 = vunpack.c.h.b16 %v272
      %v333 = vunpack.c.l.b16 %v273
      %v334 = vunpack.c.h.b16 %v273
      %v335 = vunpack.c.l.b16 %v274
      %v336 = vunpack.c.h.b16 %v274
      %v337 = vunpack.c.l.b16 %v275
      %v338 = vunpack.c.h.b16 %v275
      %v339 = vunpack.c.l.b16 %v276
      %v340 = vunpack.c.h.b16 %v276
      %v341 = vunpack.c.l.b16 %v277
      %v342 = vunpack.c.h.b16 %v277
      %v343 = vunpack.c.l.b16 %v278
      %v344 = vunpack.c.h.b16 %v278
      %v345 = vunpack.c.l.b16 %v279
      %v346 = vunpack.c.h.b16 %v279
      %v347 = vunpack.c.l.b16 %v280
      %v348 = vunpack.c.h.b16 %v280
      %v349 = vunpack.c.l.b16 %v281
      %v350 = vunpack.c.h.b16 %v281
      %v351 = vunpack.c.l.b16 %v282
      %v352 = vunpack.c.h.b16 %v282
      %v353 = vunpack.c.l.b16 %v283
      %v354 = vunpack.c.h.b16 %v283
      %v355 = vunpack.c.l.b16 %v284
      %v356 = vunpack.c.h.b16 %v284
      %v357 = vpack.c.b16 %v327, %v325
      %v358 = vpack.c.b16 %v328, %v326
      %v359 = vpack.c.b16 %v331, %v329
      %v360 = vpack.c.b16 %v332, %v330
      %v361 = vpack.c.b16 %v335, %v333
      %v362 = vpack.c.b16 %v336, %v334
      %v363 = vpack.c.b16 %v339, %v337
      %v364 = vpack.c.b16 %v340, %v338
      %v365 = vpack.c.b16 %v343, %v341
      %v366 = vpack.c.b16 %v344, %v342
      %v367 = vpack.c.b16 %v347, %v345
      %v368 = vpack.c.b16 %v348, %v346
      %v369 = vpack.c.b16 %v351, %v349
      %v370 = vpack.c.b16 %v352, %v350
      %v371 = vpack.c.b16 %v355, %v353
      %v372 = vpack.c.b16 %v356, %v354
      %389 = vmatprep.subr.bf16.mxu0 %v372
      %390 = vmatpush1.bf16.msra.mxu0 %v371
      %391 = vmatprep.subr.bf16.mxu0 %v370
      %392 = vmatpush1.bf16.msra.mxu0 %v369
      %393 = vmatprep.subr.bf16.mxu0 %v368
      %394 = vmatpush1.bf16.msra.mxu0 %v367
      %395 = vmatprep.subr.bf16.mxu0 %v366
      %396 = vmatpush1.bf16.msra.mxu0 %v365
      %397 = vmatprep.subr.bf16.mxu0 %v364
      %398 = vmatpush1.bf16.msra.mxu0 %v363
      %399 = vmatprep.subr.bf16.mxu0 %v362
      %400 = vmatpush1.bf16.msra.mxu0 %v361
      %401 = vmatprep.subr.bf16.mxu0 %v360
      %402 = vmatpush1.bf16.msra.mxu0 %v359
      %403 = vmatprep.subr.bf16.mxu0 %v358
      %404 = vmatpush1.bf16.msra.mxu0 %v357
      %405 = vmatprep.subr.bf16.mxu0 0
      %406 = vmatpush2.bf16.msra.mxu0 0
      %407 = vmatprep.subr.bf16.mxu0 0
      %408 = vmatpush2.bf16.msra.mxu0 0
      %409 = vmatprep.subr.bf16.mxu0 0
      %410 = vmatpush2.bf16.msra.mxu0 0
      %411 = vmatprep.subr.bf16.mxu0 0
      %412 = vmatpush2.bf16.msra.mxu0 0
      %413 = vmatprep.subr.bf16.mxu0 0
      %414 = vmatpush2.bf16.msra.mxu0 0
      %415 = vmatprep.subr.bf16.mxu0 0
      %416 = vmatpush2.bf16.msra.mxu0 0
      %417 = vmatprep.subr.bf16.mxu0 0
      %418 = vmatpush2.bf16.msra.mxu0 0
      %419 = vmatprep.subr.bf16.mxu0 0
      %420 = vmatpush2.bf16.msra.mxu0 0
      %421 = vmatprep.mubr.bf16.mxu0 0
      %422 = vmatmul.mubr.bf16.gmra.mxu0 %v305
      %v423 = vpop.f32.mrf.mxu0
      %v424 = vadd.f32 %v290, %v423
      %v425 = vpop.f32.mrf.mxu0
      %v426 = vadd.f32 %v294, %v425
      %v427 = vpop.f32.mrf.mxu0
      %v428 = vadd.f32 %v290, %v427
      %v429 = vpop.f32.mrf.mxu0
      %v430 = vadd.f32 %v294, %v429
      %431 = vmatprep.mubr.bf16.mxu0 0
      %432 = vmatmul.mubr.bf16.gmra.mxu0 %v306
      %v433 = vpop.f32.mrf.mxu0
      %v434 = vadd.f32 %v290, %v433
      %v435 = vpop.f32.mrf.mxu0
      %v436 = vadd.f32 %v294, %v435
      %v437 = vpop.f32.mrf.mxu0
      %v438 = vadd.f32 %v290, %v437
      %v439 = vpop.f32.mrf.mxu0
      %v440 = vadd.f32 %v294, %v439
      %441 = vdwg.mxu0
      %v442 = vmax.f32 %v424, 0.0
      %v443 = vmax.f32 %v426, 0.0
      %v444 = vmax.f32 %v428, 0.0
      %v445 = vmax.f32 %v430, 0.0
      %v446 = vmax.f32 %v434, 0.0
      %v447 = vmax.f32 %v436, 0.0
      %v448 = vmax.f32 %v438, 0.0
      %v449 = vmax.f32 %v440, 0.0
      %v450 = vpack.c.bf16 %v444, %v442
      %v451 = vpack.c.bf16 %v445, %v443
      %v452 = vpack.c.bf16 %v448, %v446
      %v453 = vpack.c.bf16 %v449, %v447
      %v454 = vld [vmem:[%s3] sm:$0xf]
      %v455 = vld [vmem:[%s3 + $0x4] sm:$0xf]
      %v456 = vld [vmem:[%s3 + $0x8] sm:$0xf]
      %v457 = vld [vmem:[%s3 + $0xc] sm:$0xf]
      %v458 = vld [vmem:[%s3 + $0x10] sm:$0xf]
      %v459 = vld [vmem:[%s3 + $0x14] sm:$0xf]
      %v460 = vld [vmem:[%s3 + $0x18] sm:$0xf]
      %v461 = vld [vmem:[%s3 + $0x1c] sm:$0xf]
      %v462 = vld [vmem:[%s3 + $0x20] sm:$0xf]
      %v463 = vld [vmem:[%s3 + $0x24] sm:$0xf]
      %v464 = vld [vmem:[%s3 + $0x28] sm:$0xf]
      %v465 = vld [vmem:[%s3 + $0x2c] sm:$0xf]
      %v466 = vld [vmem:[%s3 + $0x30] sm:$0xf]
      %v467 = vld [vmem:[%s3 + $0x34] sm:$0xf]
      %v468 = vld [vmem:[%s3 + $0x38] sm:$0xf]
      %v469 = vld [vmem:[%s3 + $0x3c] sm:$0xf]
      %v470 = vld [vmem:[%s3 + $0x40] sm:$0xf]
      %v471 = vld [vmem:[%s3 + $0x44] sm:$0xf]
      %v472 = vld [vmem:[%s3 + $0x48] sm:$0xf]
      %v473 = vld [vmem:[%s3 + $0x4c] sm:$0xf]
      %v474 = vld [vmem:[%s3 + $0x50] sm:$0xf]
      %v475 = vld [vmem:[%s3 + $0x54] sm:$0xf]
      %v476 = vld [vmem:[%s3 + $0x58] sm:$0xf]
      %v477 = vld [vmem:[%s3 + $0x5c] sm:$0xf]
      %v478 = vld [vmem:[%s3 + $0x60] sm:$0xf]
      %v479 = vld [vmem:[%s3 + $0x64] sm:$0xf]
      %v480 = vld [vmem:[%s3 + $0x68] sm:$0xf]
      %v481 = vld [vmem:[%s3 + $0x6c] sm:$0xf]
      %v482 = vld [vmem:[%s3 + $0x70] sm:$0xf]
      %v483 = vld [vmem:[%s3 + $0x74] sm:$0xf]
      %v484 = vld [vmem:[%s3 + $0x78] sm:$0xf]
      %v485 = vld [vmem:[%s3 + $0x7c] sm:$0xf]
      %v486 = vld [vmem:[%s4] sm:$0x1]
      %v488 = vlaneseq
      %v489 = vshrl.u32 %v488, 7
      %v490 = vsub.s32 0, %v489
      %v491 = vrot.slane %v486, %v490
      %v525 = vunpack.c.l.b16 %v454
      %v526 = vunpack.c.l.b16 %v455
      %v527 = vunpack.c.l.b16 %v456
      %v528 = vunpack.c.l.b16 %v457
      %v529 = vunpack.c.l.b16 %v458
      %v530 = vunpack.c.l.b16 %v459
      %v531 = vunpack.c.l.b16 %v460
      %v532 = vunpack.c.l.b16 %v461
      %v533 = vunpack.c.l.b16 %v462
      %v534 = vunpack.c.l.b16 %v463
      %v535 = vunpack.c.l.b16 %v464
      %v536 = vunpack.c.l.b16 %v465
      %v537 = vunpack.c.l.b16 %v466
      %v538 = vunpack.c.l.b16 %v467
      %v539 = vunpack.c.l.b16 %v468
      %v540 = vunpack.c.l.b16 %v469
      %v541 = vunpack.c.l.b16 %v470
      %v542 = vunpack.c.l.b16 %v471
      %v543 = vunpack.c.l.b16 %v472
      %v544 = vunpack.c.l.b16 %v473
      %v545 = vunpack.c.l.b16 %v474
      %v546 = vunpack.c.l.b16 %v475
      %v547 = vunpack.c.l.b16 %v476
      %v548 = vunpack.c.l.b16 %v477
      %v549 = vunpack.c.l.b16 %v478
      %v550 = vunpack.c.l.b16 %v479
      %v551 = vunpack.c.l.b16 %v480
      %v552 = vunpack.c.l.b16 %v481
      %v553 = vunpack.c.l.b16 %v482
      %v554 = vunpack.c.l.b16 %v483
      %v555 = vunpack.c.l.b16 %v484
      %v556 = vunpack.c.l.b16 %v485
      %v557 = vpack.c.b16 %v526, %v525
      %v558 = vpack.c.b16 %v528, %v527
      %v559 = vpack.c.b16 %v530, %v529
      %v560 = vpack.c.b16 %v532, %v531
      %v561 = vpack.c.b16 %v534, %v533
      %v562 = vpack.c.b16 %v536, %v535
      %v563 = vpack.c.b16 %v538, %v537
      %v564 = vpack.c.b16 %v540, %v539
      %v565 = vpack.c.b16 %v542, %v541
      %v566 = vpack.c.b16 %v544, %v543
      %v567 = vpack.c.b16 %v546, %v545
      %v568 = vpack.c.b16 %v548, %v547
      %v569 = vpack.c.b16 %v550, %v549
      %v570 = vpack.c.b16 %v552, %v551
      %v571 = vpack.c.b16 %v554, %v553
      %v572 = vpack.c.b16 %v556, %v555
      %589 = vmatprep.subr.bf16.mxu0 0
      %590 = vmatpush1.bf16.msra.mxu0 %v564
      %591 = vmatprep.subr.bf16.mxu0 0
      %592 = vmatpush1.bf16.msra.mxu0 %v563
      %593 = vmatprep.subr.bf16.mxu0 0
      %594 = vmatpush1.bf16.msra.mxu0 %v562
      %595 = vmatprep.subr.bf16.mxu0 0
      %596 = vmatpush1.bf16.msra.mxu0 %v561
      %597 = vmatprep.subr.bf16.mxu0 0
      %598 = vmatpush1.bf16.msra.mxu0 %v560
      %599 = vmatprep.subr.bf16.mxu0 0
      %600 = vmatpush1.bf16.msra.mxu0 %v559
      %601 = vmatprep.subr.bf16.mxu0 0
      %602 = vmatpush1.bf16.msra.mxu0 %v558
      %603 = vmatprep.subr.bf16.mxu0 0
      %604 = vmatpush1.bf16.msra.mxu0 %v557
      %605 = vmatprep.subr.bf16.mxu0 0
      %606 = vmatpush2.bf16.msra.mxu0 %v572
      %607 = vmatprep.subr.bf16.mxu0 0
      %608 = vmatpush2.bf16.msra.mxu0 %v571
      %609 = vmatprep.subr.bf16.mxu0 0
      %610 = vmatpush2.bf16.msra.mxu0 %v570
      %611 = vmatprep.subr.bf16.mxu0 0
      %612 = vmatpush2.bf16.msra.mxu0 %v569
      %613 = vmatprep.subr.bf16.mxu0 0
      %614 = vmatpush2.bf16.msra.mxu0 %v568
      %615 = vmatprep.subr.bf16.mxu0 0
      %616 = vmatpush2.bf16.msra.mxu0 %v567
      %617 = vmatprep.subr.bf16.mxu0 0
      %618 = vmatpush2.bf16.msra.mxu0 %v566
      %619 = vmatprep.subr.bf16.mxu0 0
      %620 = vmatpush2.bf16.msra.mxu0 %v565
      %621 = vmatprep.mubr.bf16.mxu0 %v451
      %622 = vmatmul.mubr.bf16.gmra.mxu0 %v450
      %v623 = vpop.f32.mrf.mxu0
      %v624 = vadd.f32 %v491, %v623
      %v625 = vpop.f32.mrf.mxu0
      %v626 = vpop.f32.mrf.mxu0
      %v627 = vadd.f32 %v491, %v626
      %v628 = vpop.f32.mrf.mxu0
      %629 = vmatprep.mubr.bf16.mxu0 %v453
      %630 = vmatmul.mubr.bf16.gmra.mxu0 %v452
      %v631 = vpop.f32.mrf.mxu0
      %v632 = vadd.f32 %v491, %v631
      %v633 = vpop.f32.mrf.mxu0
      %v634 = vpop.f32.mrf.mxu0
      %v635 = vadd.f32 %v491, %v634
      %v636 = vpop.f32.mrf.mxu0
      %637 = vdwg.mxu0
      %638 = vst [vmem:[%s262] sm:$0xff] %v624
      %639 = vst [vmem:[%s262 + $0x8] sm:$0xff] %v627
      %640 = vst [vmem:[%s262 + $0x10] sm:$0xff] %v632
      %641 = vst [vmem:[%s262 + $0x18] sm:$0xff] %v635
      %s642 = smul.u32 4, %s21
      %p643 = scmp.lt.s32.totalorder %s20, 2
      %s644 = scalar_select %p643, %s20, 2
      %p645 = scmp.lt.s32.totalorder %s642, 3
      %s646 = scalar_select %p645, %s642, 3
      %s647 = smul.addr %s644, 4
      %s648 = sadd.s32 %s646, %s647
      %s649 = smul.addr %s648, 8
      %s650 = scalar_lea.vmem %s5, %s649
      // Predicated region
      $region41: #{triplet_net.1} parent=39 // pred_check
        %p651 = pneg %p160
      $region42: #{triplet_net.1} parent=39 // pred_check_branch
        %653 = sbr.rel (%p651) target = $region44
      $region43: #{triplet_net.1} parent=39 // pred_region
        %s654 = smul.u32 4, %s21
      $region44: #{triplet_net.1} parent=39 // pred_fallthru
        _
    $region40: #{triplet_net.1} parent=5 // pred_fallthru
      _
    %p655 = scmp.le.s32.totalorder 2, %s11
    // Predicated region
    $region45: #{triplet_net.1} parent=5 // pred_check
      %p656 = pneg %p655
    $region46: #{triplet_net.1} parent=5 // pred_check_branch
      %658 = sbr.rel (%p656) target = $region48
    $region47: #{triplet_net.1} parent=5 // pred_region
      %s659 = ssub.s32 %s11, 2
      // Predicated region
      $region49: #{triplet_net.1} parent=47 // pred_check
        %p660 = pneg %p166
      $region50: #{triplet_net.1} parent=47 // pred_check_branch
        %662 = sbr.rel (%p660) target = $region52
      $region51: #{triplet_net.1} parent=47 // pred_region
        %s663 = smul.u32 4, %s23
        %p664 = scmp.lt.s32.totalorder %s22, 2
        %s665 = scalar_select %p664, %s22, 2
        %p666 = scmp.lt.s32.totalorder %s663, 3
        %s667 = scalar_select %p666, %s663, 3
        %s668 = smul.addr %s665, 4
        %s669 = sadd.s32 %s667, %s668
        %s670 = smul.addr %s669, 8
        %s671 = scalar_lea.vmem %s5, %s670
      $region52: #{triplet_net.1} parent=47 // pred_fallthru
        _
    $region48: #{triplet_net.1} parent=5 // pred_fallthru
      _
  $region6: #{triplet_net.1} parent=0 // loop_footer
    %s15 = sadd.s32 1, %s11
  $region7: #{triplet_net.1} parent=0 // loop_footer_branch
    %10 = sbr.rel target = $region3
  $region8: #{triplet_net.1} parent=0 // loop_exit
    _

</llo_original>
